<compile_context>
chip_gen: v5e
topology: v5e:2x2
jax: 0.10.0
libtpu: 0.0.40
codegen_flags: <defaults>
</compile_context>

<pallas_src>
import functools

import jax
import jax.numpy as jnp
from jax.experimental import pallas as pl
from jax.experimental.pallas import tpu as pltpu


# ---------------------------------------------------------------------------
# Shared per-tile loss math
# ---------------------------------------------------------------------------
def _loss_columns(x, lbl, valid, *, lb_pos, lb_neg, num_classes, exp_dtype):
    """Label-smoothed CE for one (BN, C, TS) tile.

    x     : (BN, C, TS) logits in native dtype (f32 or bf16)
    lbl   : (BN, 1, TS) int32 labels (may contain ignore_index / garbage)
    valid : (BN, 1, TS) bool, positions that contribute to the loss
    returns (BN, 1, TS) float32 loss, zero where not valid.
    """
    tgt = jnp.where(valid, lbl, 0)                                # clamp

    # Numerically stable log-sum-exp over the class (sublane) axis.
    m = jnp.max(x, axis=1, keepdims=True)                         # (BN,1,TS)
    e = jnp.exp((x - m).astype(exp_dtype))                        # EUP path
    denom = jnp.sum(e, axis=1, keepdims=True, dtype=jnp.float32)
    lse = m.astype(jnp.float32) + jnp.log(denom)                  # (BN,1,TS)

    sum_x = jnp.sum(x, axis=1, keepdims=True, dtype=jnp.float32)

    # (1,C,1) class iota broadcast against the (BN,1,TS) target: no (C,TS)
    # int32 temporary is materialized.
    cls = jax.lax.broadcasted_iota(jnp.int32, (1, num_classes, 1), 1)
    x_tgt = jnp.sum(jnp.where(cls == tgt, x, jnp.zeros((), x.dtype)),
                    axis=1, keepdims=True, dtype=jnp.float32)

    # loss = sum_c smooth_c * (lse - x_c)
    #      = lb_neg*(C*lse - sum_x) + (lb_pos - lb_neg)*(lse - x_tgt)
    loss = (lb_neg * (num_classes * lse - sum_x)
            + (lb_pos - lb_neg) * (lse - x_tgt))
    return jnp.where(valid, loss, 0.0)


# ---------------------------------------------------------------------------
# Kernels
# ---------------------------------------------------------------------------
def _lsce_elem_kernel(logits_ref, label_ref, loss_ref, *, lb_pos, lb_neg,
                      lb_ignore, num_classes, exp_dtype):
    # reduction='none': write per-position loss. Tail lanes are dropped by
    # Pallas on store and lane columns are independent, so no masking needed.
    x = logits_ref[...]                                           # (BN,C,TS)
    lbl = label_ref[...]                                          # (BN,1,TS)
    valid = lbl != lb_ignore
    loss_ref[...] = _loss_columns(x, lbl, valid, lb_pos=lb_pos, lb_neg=lb_neg,
                                  num_classes=num_classes, exp_dtype=exp_dtype)


def _lsce_partial_kernel(logits_ref, label_ref, part_ref, *, lb_pos, lb_neg,
                         lb_ignore, num_classes, exp_dtype, n_total, s_total,
                         bn, ts):
    # reduction='mean'/'sum': emit per-grid-cell partial sums only.
    n = pl.program_id(0)
    s = pl.program_id(1)

    x = logits_ref[...]                                           # (BN,C,TS)
    lbl = label_ref[...]                                          # (BN,1,TS)

    # Mask ragged spatial / batch tails (garbage lanes) and ignored labels.
    lane = jax.lax.broadcasted_iota(jnp.int32, (1, 1, ts), 2) + s * ts
    row = jax.lax.broadcasted_iota(jnp.int32, (bn, 1, 1), 0) + n * bn
    in_bounds = (lane < s_total) & (row < n_total)                # (BN,1,TS)
    valid = in_bounds & (lbl != lb_ignore)

    loss = _loss_columns(x, lbl, valid, lb_pos=lb_pos, lb_neg=lb_neg,
                         num_classes=num_classes, exp_dtype=exp_dtype)

    loss_sum = jnp.sum(loss)                                      # scalar f32
    cnt_sum = jnp.sum(valid.astype(jnp.float32))                  # scalar f32

    # part_ref: (1,1,2,128). Row 0 = loss partial, row 1 = valid count,
    # broadcast across lanes (host reads lane 0). Lane-dense unmasked store.
    row_idx = jax.lax.broadcasted_iota(jnp.int32, (1, 1, 2, 128), 2)
    part_ref[...] = jnp.where(row_idx == 0, loss_sum, cnt_sum)


# ---------------------------------------------------------------------------
# Tile planning (generation aware)
# ---------------------------------------------------------------------------
def _device_kind():
    try:
        return jax.devices()[0].device_kind.lower()
    except Exception:
        return ""


def _plan_tiles(N, C, S, in_itemsize, *, elementwise_out, is_v7x, kind):
    # VMEM budget per generation: v7x has 64 MiB physical; v4/v5/v6 have
    # 128 MiB.  Budget covers double-buffered logits/labels + ~3 (C,TS)-sized
    # f32 temporaries (exp, masked-select, upcast) produced in-kernel.
    if is_v7x:
        data_budget, vmem_limit = 40 << 20, 48 << 20
    elif any(t in kind for t in ("v4", "v5", "v6")):
        data_budget, vmem_limit = 64 << 20, 96 << 20
    else:  # unknown chip / interpret mode: stay conservative
        data_budget, vmem_limit = 16 << 20, 32 << 20

    bytes_per_lane_row = 2 * C * in_itemsize + 3 * C * 4 + 2 * 4
    if elementwise_out:
        bytes_per_lane_row += 2 * 4  # double-buffered f32 loss output

    MAX_LANE_WORK = 32768  # lane extent cap per grid step (vreg pressure)

    # Pack several batch rows per step on small-spatial / large-batch shapes.
    if S <= 512 and N > 1:
        bn = max(1, min(N, MAX_LANE_WORK // max(S, 1),
                        data_budget // max(1, bytes_per_lane_row * S)))
    else:
        bn = 1

    ts = (data_budget // max(1, bn * bytes_per_lane_row)) // 128 * 128
    ts = max(128, min(ts, max(128, (MAX_LANE_WORK // bn) // 128 * 128)))
    if ts >= S:
        ts = S  # single spatial block (full extent is always a legal block)

    gn = pl.cdiv(N, bn)
    gs = pl.cdiv(S, ts)

    # v7x has 2 TensorCores per chip: make sure the parallel grid has >= 2
    # steps so both cores get work (no-op cost on 1-TC chips, so v7x-only).
    if is_v7x and gn * gs < 2:
        if S > 128:
            ts = (((S + 1) // 2) + 127) // 128 * 128
            gs = pl.cdiv(S, ts)
        elif bn > 1:
            bn = (bn + 1) // 2
            gn = pl.cdiv(N, bn)

    return bn, ts, gn, gs, vmem_limit


# ---------------------------------------------------------------------------
# Public wrapper (forward of LabelSmoothSoftmaxCEV2)
# ---------------------------------------------------------------------------
def label_smooth_softmax_ce(logits, label, *, label_smooth=0.1,
                            reduction="mean", ignore_index=-100):
    """logits: (N, C, *spatial) f32/bf16; label: (N, *spatial) int."""
    N, C = logits.shape[0], logits.shape[1]
    spatial = logits.shape[2:]
    S = 1
    for d in spatial:
        S *= d

    lb_pos = 1.0 - label_smooth
    lb_neg = label_smooth / C

    # Free reshapes only -- no transpose, no padding of the logits.
    x = logits.reshape(N, C, S)
    lbl = label.reshape(N, 1, S).astype(jnp.int32)

    kind = _device_kind()
    is_v7x = ("v7" in kind) or ("tpu7" in kind)
    is_v5e = ("v5 lite" in kind) or ("v5e" in kind) or ("v5litepod" in kind)

    bn, ts, gn, gs, vmem_limit = _plan_tiles(
        N, C, S, x.dtype.itemsize,
        elementwise_out=(reduction == "none"), is_v7x=is_v7x, kind=kind)

    # bf16 EUP exp path on v6e/v7x; v5e has no bf16 VPU/EUP -> f32 exp.
    exp_dtype = (jnp.bfloat16
                 if (x.dtype == jnp.bfloat16 and not is_v5e) else jnp.float32)

    # TODO(synk): for vocabulary-scale C (>=16k classes) add a class-tiled
    # "arbitrary" grid axis with a streaming logsumexp instead of one C-tall
    # tile; for spatial-less (N, C) classification, a transpose to put N on
    # lanes would use lanes better.

    grid = (gn, gs)
    in_specs = [
        pl.BlockSpec((bn, C, ts), lambda n, s: (n, 0, s)),
        pl.BlockSpec((bn, 1, ts), lambda n, s: (n, 0, s)),
    ]
    cparams = pltpu.CompilerParams(
        dimension_semantics=("parallel", "parallel"),
        vmem_limit_bytes=vmem_limit)

    if reduction == "none":
        kernel = functools.partial(
            _lsce_elem_kernel, lb_pos=lb_pos, lb_neg=lb_neg,
            lb_ignore=ignore_index, num_classes=C, exp_dtype=exp_dtype)
        loss = pl.pallas_call(
            kernel,
            out_shape=jax.ShapeDtypeStruct((N, 1, S), jnp.float32),
            grid_spec=pltpu.PrefetchScalarGridSpec(
                num_scalar_prefetch=0, grid=grid, in_specs=in_specs,
                out_specs=pl.BlockSpec((bn, 1, ts), lambda n, s: (n, 0, s))),
            compiler_params=cparams,
        )(x, lbl)
        return loss.reshape((N,) + spatial)

    if reduction not in ("mean", "sum"):
        raise ValueError(f"unknown reduction {reduction!r}")

    # Fused reduction: kernel emits tiny per-grid-cell partials; final scalar
    # reduce over (gn*gs) values happens in plain JAX (no full loss writeback,
    # no second pass over the labels).
    kernel = functools.partial(
        _lsce_partial_kernel, lb_pos=lb_pos, lb_neg=lb_neg,
        lb_ignore=ignore_index, num_classes=C, exp_dtype=exp_dtype,
        n_total=N, s_total=S, bn=bn, ts=ts)
    parts = pl.pallas_call(
        kernel,
        out_shape=jax.ShapeDtypeStruct((gn, gs, 2, 128), jnp.float32),
        grid_spec=pltpu.PrefetchScalarGridSpec(
            num_scalar_prefetch=0, grid=grid, in_specs=in_specs,
            out_specs=pl.BlockSpec((1, 1, 2, 128),
                                   lambda n, s: (n, s, 0, 0))),
        compiler_params=cparams,
    )(x, lbl)

    total = jnp.sum(parts[:, :, 0, 0])
    if reduction == "sum":
        return total
    # 'mean': divide by number of non-ignored positions (counted in-kernel).
    # NOTE: an all-ignored input divides by zero, matching the PyTorch module.
    n_valid = jnp.sum(parts[:, :, 1, 0])
    return total / n_valid


# ---------------------------------------------------------------------------
# Pure-JAX reference (mirrors the PyTorch forward) + smoke test
# ---------------------------------------------------------------------------
def _reference(logits, label, *, label_smooth=0.1, reduction="mean",
               ignore_index=-100):
    num_classes = logits.shape[1]
    lb_pos = 1.0 - label_smooth
    lb_neg = label_smooth / num_classes
    ignore = label == ignore_index
    n_valid = jnp.sum(~ignore)
    tgt = jnp.where(ignore, 0, label)
    onehot = jax.nn.one_hot(tgt, num_classes, axis=1, dtype=jnp.float32)
    smooth = onehot * lb_pos + (1.0 - onehot) * lb_neg
    smooth = jnp.where(jnp.expand_dims(ignore, 1), 0.0, smooth)
    logp = jax.nn.log_softmax(logits.astype(jnp.float32), axis=1)
    loss = jnp.sum(-logp * smooth, axis=1)
    if reduction == "mean":
        return loss.sum() / n_valid
    if reduction == "sum":
        return loss.sum()
    return loss


if __name__ == "__main__":
    key = jax.random.PRNGKey(0)
    k1, k2, k3, k4, k5, k6 = jax.random.split(key, 6)

    ok = True

    # Case 1: N=2, C=4, 16x16 spatial, f32 logits, ~10% ignored labels.
    N, C, H, W = 2, 4, 16, 16
    logits = jax.random.normal(k1, (N, C, H, W), dtype=jnp.float32)
    label = jax.random.randint(k2, (N, H, W), 0, C, dtype=jnp.int32)
    label = jnp.where(jax.random.uniform(k3, (N, H, W)) < 0.1, -100, label)
    for red in ("mean", "sum", "none"):
        out = jax.block_until_ready(
            label_smooth_softmax_ce(logits, label, label_smooth=0.1,
                                    reduction=red, ignore_index=-100))
        ref = _reference(logits, label, label_smooth=0.1, reduction=red,
                         ignore_index=-100)
        if not jnp.allclose(out, ref, atol=1e-5, rtol=1e-4):
            ok = False

    # Case 2: ragged spatial (13x13) to exercise tail masking in the fused
    # partial-sum path, N=3, C=5, ~20% ignored labels.
    N, C, H, W = 3, 5, 13, 13
    logits = jax.random.normal(k4, (N, C, H, W), dtype=jnp.float32)
    label = jax.random.randint(k5, (N, H, W), 0, C, dtype=jnp.int32)
    label = jnp.where(jax.random.uniform(k6, (N, H, W)) < 0.2, -100, label)
    for red in ("mean", "sum", "none"):
        out = jax.block_until_ready(
            label_smooth_softmax_ce(logits, label, label_smooth=0.1,
                                    reduction=red, ignore_index=-100))
        ref = _reference(logits, label, label_smooth=0.1, reduction=red,
                         ignore_index=-100)
        if not jnp.allclose(out, ref, atol=1e-5, rtol=1e-4):
            ok = False

    print("KERNEL_OK" if ok else "KERNEL_MISMATCH")
</pallas_src>

<mosaic_0001>
module attributes {stable_mosaic.version = 11 : i64} {
  func.func @_lsce_partial_kernel(%arg0: i32, %arg1: i32, %arg2: memref<2x4x256xf32, #tpu.memory_space<vmem>>, %arg3: memref<2x1x256xi32, #tpu.memory_space<vmem>>, %arg4: memref<1x1x2x128xf32, #tpu.memory_space<vmem>>) attributes {dimension_semantics = [#tpu.dimension_semantics<parallel>, #tpu.dimension_semantics<parallel>], iteration_bounds = array<i64: 1, 1>, scalar_prefetch = 0 : i64, scratch_operands = 0 : i64, tpu.core_type = #tpu.core_type<tc>, window_params = [{transform_indices = @transform_0, window_bounds = array<i64: 2, 4, 256>}, {transform_indices = @transform_1, window_bounds = array<i64: 2, 1, 256>}, {transform_indices = @transform_2, window_bounds = array<i64: 1, 1, 2, 128>}]} {
    %c0 = arith.constant 0 : index
    %c0_0 = arith.constant 0 : index
    %c0_1 = arith.constant 0 : index
    %0 = vector.load %arg2[%c0, %c0_0, %c0_1] : memref<2x4x256xf32, #tpu.memory_space<vmem>>, vector<2x4x256xf32>
    %c0_2 = arith.constant 0 : index
    %c0_3 = arith.constant 0 : index
    %c0_4 = arith.constant 0 : index
    %1 = vector.load %arg3[%c0_2, %c0_3, %c0_4] : memref<2x1x256xi32, #tpu.memory_space<vmem>>, vector<2x1x256xi32>
    %2 = tpu.iota {dimensions = array<i32: 2>} : vector<1x1x256xi32>
    %c256_i32 = arith.constant 256 : i32
    %3 = arith.muli %arg1, %c256_i32 : i32
    %4 = vector.broadcast %3 : i32 to vector<1x1x256xi32>
    %5 = arith.addi %2, %4 : vector<1x1x256xi32>
    %6 = tpu.iota {dimensions = array<i32: 0>} : vector<2x1x1xi32>
    %c2_i32 = arith.constant 2 : i32
    %7 = arith.muli %arg0, %c2_i32 : i32
    %8 = vector.broadcast %7 : i32 to vector<2x1x1xi32>
    %9 = arith.addi %6, %8 : vector<2x1x1xi32>
    %c256_i32_5 = arith.constant 256 : i32
    %10 = vector.broadcast %c256_i32_5 : i32 to vector<1x1x256xi32>
    %11 = arith.cmpi slt, %5, %10 : vector<1x1x256xi32>
    %c2_i32_6 = arith.constant 2 : i32
    %12 = vector.broadcast %c2_i32_6 : i32 to vector<2x1x1xi32>
    %13 = arith.cmpi slt, %9, %12 : vector<2x1x1xi32>
    %14 = vector.broadcast %11 : vector<1x1x256xi1> to vector<2x1x256xi1>
    %15 = vector.broadcast %13 : vector<2x1x1xi1> to vector<2x1x256xi1>
    %16 = arith.andi %14, %15 : vector<2x1x256xi1>
    %c-100_i32 = arith.constant -100 : i32
    %17 = vector.broadcast %c-100_i32 : i32 to vector<2x1x256xi32>
    %18 = arith.cmpi ne, %1, %17 : vector<2x1x256xi32>
    %19 = arith.andi %16, %18 : vector<2x1x256xi1>
    %c0_i32 = arith.constant 0 : i32
    %20 = vector.broadcast %c0_i32 : i32 to vector<2x1x256xi32>
    %21 = arith.select %19, %1, %20 : vector<2x1x256xi1>, vector<2x1x256xi32>
    %cst = arith.constant dense<0xFF800000> : vector<2x256xf32>
    %22 = vector.multi_reduction <maximumf>, %0, %cst [1] : vector<2x4x256xf32> to vector<2x256xf32>
    %23 = vector.shape_cast %22 : vector<2x256xf32> to vector<2x1x256xf32>
    %24 = vector.broadcast %23 : vector<2x1x256xf32> to vector<2x4x256xf32>
    %25 = arith.subf %0, %24 : vector<2x4x256xf32>
    %26 = math.exp %25 : vector<2x4x256xf32>
    %cst_7 = arith.constant dense<0.000000e+00> : vector<2x256xf32>
    %27 = vector.multi_reduction <add>, %26, %cst_7 [1] : vector<2x4x256xf32> to vector<2x256xf32>
    %28 = vector.shape_cast %27 : vector<2x256xf32> to vector<2x1x256xf32>
    %29 = math.log %28 : vector<2x1x256xf32>
    %30 = arith.addf %23, %29 : vector<2x1x256xf32>
    %cst_8 = arith.constant dense<0.000000e+00> : vector<2x256xf32>
    %31 = vector.multi_reduction <add>, %0, %cst_8 [1] : vector<2x4x256xf32> to vector<2x256xf32>
    %32 = vector.shape_cast %31 : vector<2x256xf32> to vector<2x1x256xf32>
    %33 = tpu.iota {dimensions = array<i32: 1>} : vector<1x4x1xi32>
    %34 = vector.broadcast %33 : vector<1x4x1xi32> to vector<2x4x256xi32>
    %35 = vector.broadcast %21 : vector<2x1x256xi32> to vector<2x4x256xi32>
    %36 = arith.cmpi eq, %34, %35 : vector<2x4x256xi32>
    %cst_9 = arith.constant 0.000000e+00 : f32
    %37 = vector.broadcast %cst_9 : f32 to vector<2x4x256xf32>
    %38 = arith.select %36, %0, %37 : vector<2x4x256xi1>, vector<2x4x256xf32>
    %cst_10 = arith.constant dense<0.000000e+00> : vector<2x256xf32>
    %39 = vector.multi_reduction <add>, %38, %cst_10 [1] : vector<2x4x256xf32> to vector<2x256xf32>
    %40 = vector.shape_cast %39 : vector<2x256xf32> to vector<2x1x256xf32>
    %cst_11 = arith.constant 4.000000e+00 : f32
    %41 = vector.broadcast %cst_11 : f32 to vector<2x1x256xf32>
    %42 = arith.mulf %41, %30 : vector<2x1x256xf32>
    %43 = arith.subf %42, %32 : vector<2x1x256xf32>
    %cst_12 = arith.constant 2.500000e-02 : f32
    %44 = vector.broadcast %cst_12 : f32 to vector<2x1x256xf32>
    %45 = arith.mulf %44, %43 : vector<2x1x256xf32>
    %46 = arith.subf %30, %40 : vector<2x1x256xf32>
    %cst_13 = arith.constant 8.750000e-01 : f32
    %47 = vector.broadcast %cst_13 : f32 to vector<2x1x256xf32>
    %48 = arith.mulf %47, %46 : vector<2x1x256xf32>
    %49 = arith.addf %45, %48 : vector<2x1x256xf32>
    %cst_14 = arith.constant 0.000000e+00 : f32
    %50 = vector.broadcast %cst_14 : f32 to vector<2x1x256xf32>
    %51 = arith.select %19, %49, %50 : vector<2x1x256xi1>, vector<2x1x256xf32>
    %52 = vector.shape_cast %51 : vector<2x1x256xf32> to vector<1x2x1x256xf32>
    %cst_15 = arith.constant dense<0.000000e+00> : vector<1xf32>
    %53 = vector.multi_reduction <add>, %52, %cst_15 [1, 2, 3] : vector<1x2x1x256xf32> to vector<1xf32>
    %54 = vector.shape_cast %53 : vector<1xf32> to vector<1x1x1x1xf32>
    %55 = vector.extract %54[0, 0, 0, 0] : f32 from vector<1x1x1x1xf32>
    %56 = arith.extui %19 : vector<2x1x256xi1> to vector<2x1x256xi32>
    %57 = arith.sitofp %56 : vector<2x1x256xi32> to vector<2x1x256xf32>
    %58 = vector.shape_cast %57 : vector<2x1x256xf32> to vector<1x2x1x256xf32>
    %cst_16 = arith.constant dense<0.000000e+00> : vector<1xf32>
    %59 = vector.multi_reduction <add>, %58, %cst_16 [1, 2, 3] : vector<1x2x1x256xf32> to vector<1xf32>
    %60 = vector.shape_cast %59 : vector<1xf32> to vector<1x1x1x1xf32>
    %61 = vector.extract %60[0, 0, 0, 0] : f32 from vector<1x1x1x1xf32>
    %62 = tpu.iota {dimensions = array<i32: 2>} : vector<1x1x2x128xi32>
    %c0_i32_17 = arith.constant 0 : i32
    %63 = vector.broadcast %c0_i32_17 : i32 to vector<1x1x2x128xi32>
    %64 = arith.cmpi eq, %62, %63 : vector<1x1x2x128xi32>
    %65 = vector.broadcast %55 : f32 to vector<1x1x2x128xf32>
    %66 = vector.broadcast %61 : f32 to vector<1x1x2x128xf32>
    %67 = arith.select %64, %65, %66 : vector<1x1x2x128xi1>, vector<1x1x2x128xf32>
    %c0_18 = arith.constant 0 : index
    %c0_19 = arith.constant 0 : index
    %c0_20 = arith.constant 0 : index
    %c0_21 = arith.constant 0 : index
    %68 = vector.load %arg4[%c0_18, %c0_19, %c0_20, %c0_21] : memref<1x1x2x128xf32, #tpu.memory_space<vmem>>, vector<1x1x2x128xf32>
    tpu.vector_store %arg4[%c0_18, %c0_19, %c0_20, %c0_21], %67 {strides = array<i32>} : memref<1x1x2x128xf32, #tpu.memory_space<vmem>>, vector<1x1x2x128xf32>,
    return
  }
  func.func @transform_0(%arg0: i32, %arg1: i32) -> (i32, i32, i32) {
    %c0_i32 = arith.constant 0 : i32
    %c0_i32_0 = arith.constant 0 : i32
    return %arg0, %c0_i32, %arg1 : i32, i32, i32
  }
  func.func @transform_1(%arg0: i32, %arg1: i32) -> (i32, i32, i32) {
    %c0_i32 = arith.constant 0 : i32
    %c0_i32_0 = arith.constant 0 : i32
    return %arg0, %c0_i32, %arg1 : i32, i32, i32
  }
  func.func @transform_2(%arg0: i32, %arg1: i32) -> (i32, i32, i32, i32) {
    %c0_i32 = arith.constant 0 : i32
    %c0_i32_0 = arith.constant 0 : i32
    %c0_i32_1 = arith.constant 0 : i32
    return %arg0, %arg1, %c0_i32, %c0_i32_0 : i32, i32, i32, i32
  }
}

</mosaic_0001>

<llo_original>
// kernel: tpu_custom_call.1
$region0: #{tpu_custom_call.1}
  #allocation0 [shape = 'u32[]', space=smem, size = 0x4, offset = 0x4, fixed_abs, tag = 'smem constant byte address 0x4 - core index']
  #allocation1 [shape = 'u32[72,128]{1,0:T(1,128)}', space=vmem, size = 0x9000, scoped, tag = 'internal scratch']
  %s0 = inlined_call_operand.hbm [shape: f32[2,4,256], index: 0, kind: input, shape index: {}]
  %s1 = inlined_call_operand.hbm [shape: s32[2,1,256], index: 1, kind: input, shape index: {}]
  %s2 = inlined_call_operand.hbm [shape: f32[1,1,2,128], index: 2, kind: output, shape index: {}]
  %s3 = sld [smem:[#allocation0]]
  $region26: #{tpu_custom_call.1} parent=0
    _
  %s5 = ssub.s32 1, %s3
  %s6 = scalar_select 0, %s5, %s3
  $region1: #{tpu_custom_call.1} parent=0
    #allocation2 [shape = 'u8[8192]{0}', space=vmem, size = 0x2000, scoped, tag = 'input window, operand 0, single buffered']
    #allocation3 [shape = 's32[1]{0}', space=sflag, size = 0x4, scoped, tag = 'scoped memory for tpu_custom_call.1']
    #allocation4 [shape = 's32[1]{0}', space=sflag, size = 0x4, scoped, tag = 'scoped memory for tpu_custom_call.1']
    #allocation5 [shape = 'u8[2048]{0}', space=vmem, size = 0x800, scoped, tag = 'input window, operand 1, single buffered']
    #allocation6 [shape = 's32[1]{0}', space=sflag, size = 0x4, scoped, tag = 'scoped memory for tpu_custom_call.1']
    #allocation7 [shape = 'u8[1024]{0}', space=vmem, size = 0x400, scoped, tag = 'output window, operand 0, single buffered']
    %7 = vsyncpa [#allocation3], 0
    %8 = vsyncpa [#allocation6], 0
    %9 = vsyncpa [#allocation4], 0
    // Predicated region
    $region2: #{tpu_custom_call.1} parent=1 // pred_check
      _
    $region3: #{tpu_custom_call.1} parent=1 // pred_check_branch
      %11 = sbr.rel (0) target = $region5
    $region4: #{tpu_custom_call.1} parent=1 // pred_region
      %13 = vsyncadd [#allocation3], 0
      %s14 = sshll.u32 %s0, 4
      %s15 = int_to_ptr.hbm [resolvable:$true] %s14
      %s16 = sshll.u32 [#allocation2], 4
      %s17 = int_to_ptr.vmem [resolvable:$true] %s16
      %22 = dma.hbm_to_vmem [thread:$0]  %s15, 256, %s17, [#allocation3], 128, 128, 8
    $region5: #{tpu_custom_call.1} parent=1 // pred_fallthru
      _
    // Predicated region
    $region6: #{tpu_custom_call.1} parent=1 // pred_check
      _
    $region7: #{tpu_custom_call.1} parent=1 // pred_check_branch
      %24 = sbr.rel (0) target = $region9
    $region8: #{tpu_custom_call.1} parent=1 // pred_region
      %26 = vsyncadd [#allocation6], 0
      %s27 = sshll.u32 %s1, 4
      %s28 = int_to_ptr.hbm [resolvable:$true] %s27
      %s29 = sshll.u32 [#allocation5], 4
      %s30 = int_to_ptr.vmem [resolvable:$true] %s29
      %35 = dma.hbm_to_vmem [thread:$0]  %s28, 64, %s30, [#allocation6], 32, 32, 2
    $region9: #{tpu_custom_call.1} parent=1 // pred_fallthru
      _
    // Predicated region
    $region10: #{tpu_custom_call.1} parent=1 // pred_check
      _
    $region11: #{tpu_custom_call.1} parent=1 // pred_check_branch
      %37 = sbr.rel (0) target = $region13
    $region12: #{tpu_custom_call.1} parent=1 // pred_region
      %39 = dma.done [#allocation3], 256
    $region13: #{tpu_custom_call.1} parent=1 // pred_fallthru
      _
    // Predicated region
    $region14: #{tpu_custom_call.1} parent=1 // pred_check
      _
    $region15: #{tpu_custom_call.1} parent=1 // pred_check_branch
      %41 = sbr.rel (0) target = $region17
    $region16: #{tpu_custom_call.1} parent=1 // pred_region
      %43 = dma.done [#allocation6], 64
    $region17: #{tpu_custom_call.1} parent=1 // pred_fallthru
      _
    %v44 = vld [vmem:[#allocation2] sm:$0xff]
    %v45 = vld [vmem:[#allocation2 + $0x8] sm:$0xff]
    %v46 = vld [vmem:[#allocation5] sm:$0x3]
    %v47 = vld [vmem:[#allocation5 + $0x2] sm:$0x3]
    %v48 = vlaneseq
    %v49 = vand.u32 %v48, 127
    %v50 = vadd.s32 %v49, 128
    %s51 = smul.u32 0, 256
    %v52 = vstv %s51
    %v53 = vadd.s32 %v49, %v52
    %v54 = vadd.s32 %v50, %v52
    %s55 = smul.u32 0, 2
    %v56 = vstv %s55
    %v57 = vadd.s32 %v56, 1
    %vm58 = vcmp.lt.s32.totalorder %v53, 256
    %vm59 = vcmp.lt.s32.totalorder %v54, 256
    %vm60 = vcmp.lt.s32.totalorder %v56, 2
    %vm61 = vcmp.lt.s32.totalorder %v57, 2
    %v62 = vsel %vm58, 1, 0
    %v63 = vsel %vm59, 1, 0
    %vm64 = vcmp.eq.s32.totalorder %v62, 1
    %vm65 = vcmp.eq.s32.totalorder %v63, 1
    %v66 = vsel %vm60, 1, 0
    %v67 = vsel %vm61, 1, 0
    %vm68 = vcmp.eq.s32.totalorder %v66, 1
    %vm69 = vcmp.eq.s32.totalorder %v67, 1
    %vm70 = vmand %vm64, %vm68
    %vm71 = vmand %vm65, %vm68
    %vm72 = vmand %vm64, %vm69
    %vm73 = vmand %vm65, %vm69
    %vm74 = vcmp.ne.s32.totalorder %v46, 4294967196
    %vm75 = vcmp.ne.s32.totalorder %v47, 4294967196
    %v76 = vsel %vm74, 1, 0
    %v77 = vsel %vm75, 1, 0
    %v78 = vperm.slane %v76, 0
    %v79 = vperm.slane %v76, 1
    %v80 = vperm.slane %v77, 0
    %v81 = vperm.slane %v77, 1
    %vm82 = vcmp.ne.s32.totalorder %v78, 0
    %vm83 = vcmp.ne.s32.totalorder %v79, 0
    %vm84 = vcmp.ne.s32.totalorder %v80, 0
    %vm85 = vcmp.ne.s32.totalorder %v81, 0
    %vm86 = vmand %vm70, %vm82
    %vm87 = vmand %vm71, %vm83
    %vm88 = vmand %vm72, %vm84
    %vm89 = vmand %vm73, %vm85
    %v90 = vperm.slane %v46, 0
    %v91 = vperm.slane %v46, 1
    %v92 = vperm.slane %v47, 0
    %v93 = vperm.slane %v47, 1
    %v94 = vsel %vm86, %v90, 0
    %v95 = vsel %vm87, %v91, 0
    %v96 = vsel %vm88, %v92, 0
    %v97 = vsel %vm89, %v93, 0
    %100 = vst [vmem:[#allocation1] ss:$2 sm:$0xff] %v44
    %v101 = vld.sshfl [vmem:[#allocation1] sm:$0xff pattern:$0x75316420]
    %v102 = vld.sshfl [vmem:[#allocation1 + $0x8] sm:$0xff pattern:$0x75316420]
    %s103 = scalar_lea.vmem [#allocation1], 16
    %104 = vst [vmem:[%s103] ss:$2 sm:$0xff] %v45
    %v105 = vld.sshfl [vmem:[#allocation1 + $0x10] sm:$0xff pattern:$0x75316420]
    %v106 = vld.sshfl [vmem:[#allocation1 + $0x18] sm:$0xff pattern:$0x75316420]
    %vm111 = vcmask 1043456
    %v112 = vsel %vm111, %v101, -inf
    %v113 = vrot.slane %v112, 4
    %v114 = vmax.f32 %v112, %v113
    %v115 = vrot.slane %v114, 2
    %v116 = vmax.f32 %v114, %v115
    %v117 = vrot.slane %v116, 1
    %v118 = vmax.f32 %v116, %v117
    %v119 = vsel %vm111, %v102, -inf
    %v120 = vrot.slane %v119, 4
    %v121 = vmax.f32 %v119, %v120
    %v122 = vrot.slane %v121, 2
    %v123 = vmax.f32 %v121, %v122
    %v124 = vrot.slane %v123, 1
    %v125 = vmax.f32 %v123, %v124
    %v126 = vsel %vm111, %v105, -inf
    %v127 = vrot.slane %v126, 4
    %v128 = vmax.f32 %v126, %v127
    %v129 = vrot.slane %v128, 2
    %v130 = vmax.f32 %v128, %v129
    %v131 = vrot.slane %v130, 1
    %v132 = vmax.f32 %v130, %v131
    %v133 = vsel %vm111, %v106, -inf
    %v134 = vrot.slane %v133, 4
    %v135 = vmax.f32 %v133, %v134
    %v136 = vrot.slane %v135, 2
    %v137 = vmax.f32 %v135, %v136
    %v138 = vrot.slane %v137, 1
    %v139 = vmax.f32 %v137, %v138
    %v144 = vrot.slane %v125, 4
    %v145 = vrot.slane %v139, 4
    %v146 = vsel %vm111, %v118, %v144
    %v147 = vsel %vm111, %v132, %v145
    %v150 = vsub.f32 %v44, %v146
    %v151 = vsub.f32 %v45, %v147
    %v152 = vmul.f32 %v150, 1.442695
    %v153 = vpow.pop %v152
    %v154 = vmul.f32 %v151, 1.442695
    %v155 = vpow.pop %v154
    %158 = vst [vmem:[#allocation1] ss:$2 sm:$0xff] %v153
    %v159 = vld.sshfl [vmem:[#allocation1] sm:$0xff pattern:$0x75316420]
    %v160 = vld.sshfl [vmem:[#allocation1 + $0x8] sm:$0xff pattern:$0x75316420]
    %s161 = scalar_lea.vmem [#allocation1], 16
    %162 = vst [vmem:[%s161] ss:$2 sm:$0xff] %v155
    %v163 = vld.sshfl [vmem:[#allocation1 + $0x10] sm:$0xff pattern:$0x75316420]
    %v164 = vld.sshfl [vmem:[#allocation1 + $0x18] sm:$0xff pattern:$0x75316420]
    %v169 = vsel %vm111, %v159, 0.0
    %v170 = vrot.slane %v169, 4
    %v171 = vadd.f32 %v169, %v170
    %v172 = vrot.slane %v171, 2
    %v173 = vadd.f32 %v171, %v172
    %v174 = vrot.slane %v173, 1
    %v175 = vadd.f32 %v173, %v174
    %v176 = vsel %vm111, %v160, 0.0
    %v177 = vrot.slane %v176, 4
    %v178 = vadd.f32 %v176, %v177
    %v179 = vrot.slane %v178, 2
    %v180 = vadd.f32 %v178, %v179
    %v181 = vrot.slane %v180, 1
    %v182 = vadd.f32 %v180, %v181
    %v183 = vsel %vm111, %v163, 0.0
    %v184 = vrot.slane %v183, 4
    %v185 = vadd.f32 %v183, %v184
    %v186 = vrot.slane %v185, 2
    %v187 = vadd.f32 %v185, %v186
    %v188 = vrot.slane %v187, 1
    %v189 = vadd.f32 %v187, %v188
    %v190 = vsel %vm111, %v164, 0.0
    %v191 = vrot.slane %v190, 4
    %v192 = vadd.f32 %v190, %v191
    %v193 = vrot.slane %v192, 2
    %v194 = vadd.f32 %v192, %v193
    %v195 = vrot.slane %v194, 1
    %v196 = vadd.f32 %v194, %v195
    %v197 = vlog2.pop %v175
    %v198 = vmul.f32 %v197, 0.6931472
    %v199 = vlog2.pop %v182
    %v200 = vmul.f32 %v199, 0.6931472
    %v201 = vlog2.pop %v189
    %v202 = vmul.f32 %v201, 0.6931472
    %v203 = vlog2.pop %v196
    %v204 = vmul.f32 %v203, 0.6931472
    %v205 = vadd.f32 %v118, %v198
    %v206 = vadd.f32 %v125, %v200
    %v207 = vadd.f32 %v132, %v202
    %v208 = vadd.f32 %v139, %v204
    %209 = vst [vmem:[#allocation1] ss:$2 sm:$0xff] %v44
    %v210 = vld.sshfl [vmem:[#allocation1] sm:$0xff pattern:$0x75316420]
    %v211 = vld.sshfl [vmem:[#allocation1 + $0x8] sm:$0xff pattern:$0x75316420]
    %s212 = scalar_lea.vmem [#allocation1], 16
    %213 = vst [vmem:[%s212] ss:$2 sm:$0xff] %v45
    %v214 = vld.sshfl [vmem:[#allocation1 + $0x10] sm:$0xff pattern:$0x75316420]
    %v215 = vld.sshfl [vmem:[#allocation1 + $0x18] sm:$0xff pattern:$0x75316420]
    %v220 = vsel %vm111, %v210, 0.0
    %v221 = vrot.slane %v220, 4
    %v222 = vadd.f32 %v220, %v221
    %v223 = vrot.slane %v222, 2
    %v224 = vadd.f32 %v222, %v223
    %v225 = vrot.slane %v224, 1
    %v226 = vadd.f32 %v224, %v225
    %v227 = vsel %vm111, %v211, 0.0
    %v228 = vrot.slane %v227, 4
    %v229 = vadd.f32 %v227, %v228
    %v230 = vrot.slane %v229, 2
    %v231 = vadd.f32 %v229, %v230
    %v232 = vrot.slane %v231, 1
    %v233 = vadd.f32 %v231, %v232
    %v234 = vsel %vm111, %v214, 0.0
    %v235 = vrot.slane %v234, 4
    %v236 = vadd.f32 %v234, %v235
    %v237 = vrot.slane %v236, 2
    %v238 = vadd.f32 %v236, %v237
    %v239 = vrot.slane %v238, 1
    %v240 = vadd.f32 %v238, %v239
    %v241 = vsel %vm111, %v215, 0.0
    %v242 = vrot.slane %v241, 4
    %v243 = vadd.f32 %v241, %v242
    %v244 = vrot.slane %v243, 2
    %v245 = vadd.f32 %v243, %v244
    %v246 = vrot.slane %v245, 1
    %v247 = vadd.f32 %v245, %v246
    %v248 = vlaneseq
    %v249 = vshrl.u32 %v248, 7
    %v250 = vperm.slane %v94, 0
    %v251 = vperm.slane %v95, 0
    %v252 = vperm.slane %v96, 0
    %v253 = vperm.slane %v97, 0
    %vm254 = vcmp.eq.s32.totalorder %v249, %v250
    %vm255 = vcmp.eq.s32.totalorder %v249, %v251
    %vm256 = vcmp.eq.s32.totalorder %v249, %v252
    %vm257 = vcmp.eq.s32.totalorder %v249, %v253
    %258 = vst [vmem:[#allocation1] ss:$2 sm:$0xff] %v44
    %v259 = vld.sshfl [vmem:[#allocation1] sm:$0xff pattern:$0x75316420]
    %v260 = vld.sshfl [vmem:[#allocation1 + $0x8] sm:$0xff pattern:$0x75316420]
    %s261 = scalar_lea.vmem [#allocation1], 16
    %262 = vst [vmem:[%s261] ss:$2 sm:$0xff] %v45
    %v263 = vld.sshfl [vmem:[#allocation1 + $0x10] sm:$0xff pattern:$0x75316420]
    %v264 = vld.sshfl [vmem:[#allocation1 + $0x18] sm:$0xff pattern:$0x75316420]
    %v269 = vsel %vm254, %v259, 0.0
    %v270 = vsel %vm255, %v260, 0.0
    %v271 = vsel %vm256, %v263, 0.0
    %v272 = vsel %vm257, %v264, 0.0
    %v273 = vsel %vm111, %v269, 0.0
    %v274 = vrot.slane %v273, 4
    %v275 = vadd.f32 %v273, %v274
    %v276 = vrot.slane %v275, 2
    %v277 = vadd.f32 %v275, %v276
    %v278 = vrot.slane %v277, 1
    %v279 = vadd.f32 %v277, %v278
    %v280 = vsel %vm111, %v270, 0.0
    %v281 = vrot.slane %v280, 4
    %v282 = vadd.f32 %v280, %v281
    %v283 = vrot.slane %v282, 2
    %v284 = vadd.f32 %v282, %v283
    %v285 = vrot.slane %v284, 1
    %v286 = vadd.f32 %v284, %v285
    %v287 = vsel %vm111, %v271, 0.0
    %v288 = vrot.slane %v287, 4
    %v289 = vadd.f32 %v287, %v288
    %v290 = vrot.slane %v289, 2
    %v291 = vadd.f32 %v289, %v290
    %v292 = vrot.slane %v291, 1
    %v293 = vadd.f32 %v291, %v292
    %v294 = vsel %vm111, %v272, 0.0
    %v295 = vrot.slane %v294, 4
    %v296 = vadd.f32 %v294, %v295
    %v297 = vrot.slane %v296, 2
    %v298 = vadd.f32 %v296, %v297
    %v299 = vrot.slane %v298, 1
    %v300 = vadd.f32 %v298, %v299
    %v301 = vmul.f32 %v205, 4.0
    %v302 = vmul.f32 %v206, 4.0
    %v303 = vmul.f32 %v207, 4.0
    %v304 = vmul.f32 %v208, 4.0
    %v305 = vsub.f32 %v301, %v226
    %v306 = vsub.f32 %v302, %v233
    %v307 = vsub.f32 %v303, %v240
    %v308 = vsub.f32 %v304, %v247
    %v309 = vmul.f32 %v305, 0.025
    %v310 = vmul.f32 %v306, 0.025
    %v311 = vmul.f32 %v307, 0.025
    %v312 = vmul.f32 %v308, 0.025
    %v313 = vsub.f32 %v205, %v279
    %v314 = vsub.f32 %v206, %v286
    %v315 = vsub.f32 %v207, %v293
    %v316 = vsub.f32 %v208, %v300
    %v317 = vmul.f32 %v313, 0.875
    %v318 = vmul.f32 %v314, 0.875
    %v319 = vmul.f32 %v315, 0.875
    %v320 = vmul.f32 %v316, 0.875
    %v321 = vadd.f32 %v309, %v317
    %v322 = vadd.f32 %v310, %v318
    %v323 = vadd.f32 %v311, %v319
    %v324 = vadd.f32 %v312, %v320
    %v325 = vsel %vm86, %v321, 0.0
    %v326 = vsel %vm87, %v322, 0.0
    %v327 = vsel %vm88, %v323, 0.0
    %v328 = vsel %vm89, %v324, 0.0
    %vm329 = vcmask 1040384
    %v330 = vsel %vm329, %v325, 0.0
    %v331 = vsel %vm329, %v326, 0.0
    %v332 = vadd.f32 %v330, %v331
    %v333 = vsel %vm329, %v327, 0.0
    %v334 = vadd.f32 %v332, %v333
    %v335 = vsel %vm329, %v328, 0.0
    %v336 = vadd.f32 %v334, %v335
    %337 = vadd.xlane.f32.xlu0 %v336
    %v338 = vpop.xlane.xlu0 %337
    %v339 = vrot.slane %v338, 4
    %v340 = vadd.f32 %v338, %v339
    %v341 = vrot.slane %v340, 2
    %v342 = vadd.f32 %v340, %v341
    %v343 = vrot.slane %v342, 1
    %v344 = vadd.f32 %v342, %v343
    %s345 = vtos %v344
    %v346 = vsel %vm86, 1, 0
    %v347 = vsel %vm87, 1, 0
    %v348 = vsel %vm88, 1, 0
    %v349 = vsel %vm89, 1, 0
    %v350 = vcvt.s32.f32 %v346
    %v351 = vcvt.s32.f32 %v347
    %v352 = vcvt.s32.f32 %v348
    %v353 = vcvt.s32.f32 %v349
    %v354 = vsel %vm329, %v350, 0.0
    %v355 = vsel %vm329, %v351, 0.0
    %v356 = vadd.f32 %v354, %v355
    %v357 = vsel %vm329, %v352, 0.0
    %v358 = vadd.f32 %v356, %v357
    %v359 = vsel %vm329, %v353, 0.0
    %v360 = vadd.f32 %v358, %v359
    %361 = vadd.xlane.f32.xlu0 %v360
    %v362 = vpop.xlane.xlu0 %361
    %v363 = vrot.slane %v362, 4
    %v364 = vadd.f32 %v362, %v363
    %v365 = vrot.slane %v364, 2
    %v366 = vadd.f32 %v364, %v365
    %v367 = vrot.slane %v366, 1
    %v368 = vadd.f32 %v366, %v367
    %s369 = vtos %v368
    %vm370 = vcmp.eq.s32.totalorder %v249, 0
    %v371 = vstv %s345
    %v372 = vstv %s369
    %v373 = vsel %vm370, %v371, %v372
    %374 = vst [vmem:[#allocation7] sm:$0x3] %v373
    // Predicated region
    $region18: #{tpu_custom_call.1} parent=1 // pred_check
      _
    $region19: #{tpu_custom_call.1} parent=1 // pred_check_branch
      %376 = sbr.rel (0) target = $region21
    $region20: #{tpu_custom_call.1} parent=1 // pred_region
      %378 = vsyncadd [#allocation4], 0
      %s380 = sshll.u32 [#allocation7], 4
      %s381 = int_to_ptr.vmem [resolvable:$true] %s380
      %s382 = sshll.u32 %s2, 4
      %s383 = int_to_ptr.hbm [resolvable:$true] %s382
      %385 = dma.vmem_to_hbm [thread:$0]  %s381, 32, %s383, [#allocation4]
    $region21: #{tpu_custom_call.1} parent=1 // pred_fallthru
      _
    // Predicated region
    $region22: #{tpu_custom_call.1} parent=1 // pred_check
      _
    $region23: #{tpu_custom_call.1} parent=1 // pred_check_branch
      %387 = sbr.rel (0) target = $region25
    $region24: #{tpu_custom_call.1} parent=1 // pred_region
      %389 = dma.done [#allocation4], 32
    $region25: #{tpu_custom_call.1} parent=1 // pred_fallthru
      _
    %390 = vsyncpa [#allocation3], 1
    %391 = vsyncpa [#allocation6], 1
    %392 = vsyncpa [#allocation4], 1

</llo_original>
